<compile_context>
chip_gen: v7x
topology: tpu7x:2x2x1
jax: 0.10.0
libtpu: 0.0.40
codegen_flags: <defaults>
</compile_context>

<pallas_src>
import functools

import jax
import jax.numpy as jnp
from jax.experimental import pallas as pl
from jax.experimental.pallas import tpu as pltpu


# --------------------------------------------------------------------------
# GPTLMLoss streaming kernel: per-tile cross-entropy partial sums.
# --------------------------------------------------------------------------
def _lm_ce_kernel(logits_ref, labels_ref, out_ref):
    logits = logits_ref[...].astype(jnp.float32)     # [TILE_N, V]; single in-register upcast
    labels = labels_ref[...]                         # [TILE_N, 1] int32; -1 = dropped/padded/ignored
    _, v = logits.shape

    # Picked logit straight from the (upcast) logits.  The column iota is only
    # (1, V) and broadcasts against the (TILE_N, 1) labels, so no [TILE_N, V]
    # int32 index tensor is generated/stored per grid step.
    col = jax.lax.broadcasted_iota(jnp.int32, (1, v), 1)
    picked = jnp.sum(jnp.where(col == labels, logits, 0.0), axis=-1, keepdims=True)

    # logsumexp with `logits - m` having a single consumer (exp -> sum).
    m = jnp.max(logits, axis=-1, keepdims=True)
    sumexp = jnp.sum(jnp.exp(logits - m), axis=-1, keepdims=True)
    row_loss = (m + jnp.log(sumexp)) - picked        # [TILE_N, 1]

    # Ragged-last-tile OOB garbage is confined to its own row by the per-row
    # reductions above; the select below drops it (no NaN/Inf propagation).
    valid = labels >= 0
    out_ref[0, 0] = jnp.sum(jnp.where(valid, row_loss, 0.0))


# --------------------------------------------------------------------------
# PolicyLoss kernel: tiny O(B*L), single grid step.
# --------------------------------------------------------------------------
def _policy_loss_kernel(logp_ref, old_ref, adv_ref, mask_ref, out_ref, *,
                        clip_eps: float, inv_batch: float):
    logp = logp_ref[...]                             # [B, L] f32
    old = old_ref[...]
    adv = adv_ref[...]                               # [B, 1] f32
    mask = mask_ref[...]                             # [B, L] f32
    ratio = jnp.exp(logp - old)
    surr1 = ratio * adv
    surr2 = jnp.clip(ratio, 1.0 - clip_eps, 1.0 + clip_eps) * adv
    loss = -jnp.minimum(surr1, surr2)                # [B, L]
    mask_sum = jnp.sum(mask, axis=1, keepdims=True)
    # Guard fully-masked rows (PyTorch would produce NaN here; intentional divergence).
    mask_sum = jnp.where(mask_sum > 0.0, mask_sum, 1.0)
    per_row = jnp.sum(loss * mask, axis=1, keepdims=True) / mask_sum
    out_ref[0, 0] = jnp.sum(per_row) * inv_batch


def _choose_tile_n(num_rows: int, vocab: int, itemsize: int,
                   target_bytes: int = 2 * 1024 * 1024) -> int:
    """Rows per tile: ~2 MiB of native-dtype logits per input buffer.

    Small enough that 2x double-buffered input + the live f32 temporaries stay
    well inside v7x's 64 MiB VMEM, large enough (>= ~1 MiB for big vocabs) to
    keep the HBM stream near roofline on v5e/v6e.
    """
    t = target_bytes // max(vocab * itemsize, 1)
    t = (t // 16) * 16                      # sublane-friendly for bf16 packing
    t = max(16, min(512, t))
    if num_rows <= t:
        return int(num_rows)                # one tile covering the full (possibly ragged) row dim
    return int(t)


def ppo_ptx_actor_loss(log_probs, old_log_probs, advantages, lm_logits, lm_input_ids,
                       action_mask=None, *, policy_clip_eps: float = 0.2,
                       pretrain_coef: float = 0.0, tile_rows: int | None = None):
    """JAX/Pallas equivalent of PPOPtxActorLoss.forward. Returns a scalar f32."""
    log_probs = log_probs.astype(jnp.float32)
    old_log_probs = old_log_probs.astype(jnp.float32)
    B, L = log_probs.shape
    if action_mask is None:
        action_mask = jnp.ones((B, L), jnp.float32)
    action_mask = action_mask.astype(jnp.float32)
    advantages = advantages.reshape(B, 1).astype(jnp.float32)

    Bl, T, V = lm_logits.shape
    n_total = Bl * T

    # Free leading-dim merge; NO slice copy / NO f32 upcast of the big tensor.
    logits_rows = lm_logits.reshape(n_total, V)
    itemsize = jnp.dtype(lm_logits.dtype).itemsize

    if tile_rows is None:
        tile_n = _choose_tile_n(n_total, V, itemsize)
    else:
        tile_n = min(int(tile_rows), n_total)
        if tile_n < n_total:
            tile_n = max(8, (tile_n // 8) * 8)
    num_tiles = pl.cdiv(n_total, tile_n)
    n_pad = num_tiles * tile_n

    # Tiny shifted-label vector.  Rows that do not enter the CE mean carry -1:
    #   * t == T-1 rows (the GPTLMLoss shift),
    #   * label == -100 rows (nn.CrossEntropyLoss ignore_index),
    #   * padded rows of the last tile.
    shift_labels = jnp.full((Bl, T), -1, dtype=jnp.int32)
    shift_labels = shift_labels.at[:, :T - 1].set(lm_input_ids[:, 1:].astype(jnp.int32))
    shift_labels = jnp.where(shift_labels == -100, -1, shift_labels)
    labels_rows = jnp.full((n_pad, 1), -1, dtype=jnp.int32)
    labels_rows = labels_rows.at[:n_total, 0].set(shift_labels.reshape(-1))

    # Non-ignored-label count (CrossEntropyLoss divisor), computed on the tiny label array.
    n_valid = jnp.sum((labels_rows[:, 0] >= 0).astype(jnp.float32))
    # TODO(synk): PyTorch returns NaN when every label is ignored; we return 0 instead.
    n_valid_safe = jnp.maximum(n_valid, 1.0)

    # VMEM plan: double-buffered native-dtype input + ~a handful of live f32
    # tile temporaries + small label/partial buffers.
    in_tile_bytes = tile_n * V * itemsize
    f32_tile_bytes = tile_n * V * 4
    vmem_plan = 2 * in_tile_bytes + 6 * f32_tile_bytes + (2 << 20)
    vmem_limit = int(min(max(vmem_plan, 8 << 20), 56 << 20))

    cost = pl.CostEstimate(
        flops=7 * n_total * V,
        transcendentals=n_total * V,
        bytes_accessed=n_total * V * itemsize + n_pad * 4 + num_tiles * 4)

    partials = pl.pallas_call(
        _lm_ce_kernel,
        out_shape=jax.ShapeDtypeStruct((num_tiles, 1), jnp.float32),
        grid=(num_tiles,),
        in_specs=[
            pl.BlockSpec((tile_n, V), lambda i: (i, 0)),     # streamed logits tile (native dtype)
            pl.BlockSpec((tile_n, 1), lambda i: (i, 0)),     # shifted labels (-1 = dropped)
        ],
        out_specs=pl.BlockSpec((1, 1), lambda i: (i, 0),
                               memory_space=pltpu.MemorySpace.SMEM),
        compiler_params=pltpu.CompilerParams(
            dimension_semantics=("parallel",),               # independent per-tile partials
            vmem_limit_bytes=vmem_limit),
        cost_estimate=cost,
    )(logits_rows, labels_rows)

    lm_loss = jnp.sum(partials) / n_valid_safe

    # PolicyLoss: tiny, single grid step, all blocks equal the full arrays.
    policy_out = pl.pallas_call(
        functools.partial(_policy_loss_kernel,
                          clip_eps=float(policy_clip_eps),
                          inv_batch=1.0 / float(B)),
        out_shape=jax.ShapeDtypeStruct((1, 1), jnp.float32),
        grid=(1,),
        in_specs=[
            pl.BlockSpec((B, L), lambda i: (0, 0)),
            pl.BlockSpec((B, L), lambda i: (0, 0)),
            pl.BlockSpec((B, 1), lambda i: (0, 0)),
            pl.BlockSpec((B, L), lambda i: (0, 0)),
        ],
        out_specs=pl.BlockSpec((1, 1), lambda i: (0, 0),
                               memory_space=pltpu.MemorySpace.SMEM),
        compiler_params=pltpu.CompilerParams(dimension_semantics=("arbitrary",)),
    )(log_probs, old_log_probs, advantages, action_mask)
    policy_loss = policy_out[0, 0]

    return policy_loss + pretrain_coef * lm_loss


# --------------------------------------------------------------------------
# Pure-JAX reference (mirrors the PyTorch module) and self-test.
# --------------------------------------------------------------------------
def _reference(log_probs, old_log_probs, advantages, lm_logits, lm_input_ids,
               action_mask, clip_eps, pretrain_coef):
    ratio = jnp.exp(log_probs - old_log_probs)
    adv = advantages.reshape(-1, 1)
    surr1 = ratio * adv
    surr2 = jnp.clip(ratio, 1 - clip_eps, 1 + clip_eps) * adv
    loss = -jnp.minimum(surr1, surr2)
    masked = jnp.sum(loss * action_mask, axis=1) / jnp.sum(action_mask, axis=1)
    policy_loss = jnp.mean(masked)

    V = lm_logits.shape[-1]
    sl = lm_logits.astype(jnp.float32)[:, :-1, :].reshape(-1, V)
    lab = lm_input_ids[:, 1:].reshape(-1)
    lse = jax.nn.logsumexp(sl, axis=-1)
    picked = jnp.take_along_axis(sl, lab[:, None], axis=-1)[:, 0]
    lm_loss = jnp.mean(lse - picked)
    return policy_loss + pretrain_coef * lm_loss


if __name__ == "__main__":
    key = jax.random.PRNGKey(0)
    clip_eps, pretrain_coef = 0.2, 0.1  # deterministic "module params"

    # ---- Test 1: small shapes, single tile (block == full array dims) ----
    k1, k2, k3, k4, k5 = jax.random.split(key, 5)
    B, L = 2, 8        # PPO batch / response length
    T, V = 8, 32       # LM seq length / vocab size
    log_probs = -jnp.abs(jax.random.normal(k1, (B, L), jnp.float32)) * 0.5
    old_log_probs = -jnp.abs(jax.random.normal(k2, (B, L), jnp.float32)) * 0.5
    advantages = jax.random.normal(k3, (B,), jnp.float32)
    lm_logits = jax.random.normal(k4, (B, T, V), jnp.float32).astype(jnp.bfloat16)
    lm_input_ids = jax.random.randint(k5, (B, T), 0, V, jnp.int32)
    action_mask = jnp.array([[1] * L, [1] * 5 + [0] * (L - 5)], jnp.float32)

    out1 = ppo_ptx_actor_loss(log_probs, old_log_probs, advantages, lm_logits,
                              lm_input_ids, action_mask,
                              policy_clip_eps=clip_eps, pretrain_coef=pretrain_coef)
    out1 = jax.block_until_ready(out1)
    ref1 = _reference(log_probs, old_log_probs, advantages, lm_logits, lm_input_ids,
                      action_mask, clip_eps, pretrain_coef)
    assert jnp.allclose(out1, ref1, rtol=1e-5, atol=1e-4), (out1, ref1)

    # ---- Test 2: multi-tile streaming path with a ragged last tile ----
    k6, k7 = jax.random.split(k5, 2)
    T2, V2 = 20, 256                   # n_total = 40 rows, tile_rows=16 -> 3 tiles, last ragged
    lm_logits2 = jax.random.normal(k6, (B, T2, V2), jnp.float32).astype(jnp.bfloat16)
    lm_input_ids2 = jax.random.randint(k7, (B, T2), 0, V2, jnp.int32)

    out2 = ppo_ptx_actor_loss(log_probs, old_log_probs, advantages, lm_logits2,
                              lm_input_ids2, action_mask,
                              policy_clip_eps=clip_eps, pretrain_coef=pretrain_coef,
                              tile_rows=16)
    out2 = jax.block_until_ready(out2)
    ref2 = _reference(log_probs, old_log_probs, advantages, lm_logits2, lm_input_ids2,
                      action_mask, clip_eps, pretrain_coef)
    assert jnp.allclose(out2, ref2, rtol=1e-5, atol=1e-4), (out2, ref2)

    print("KERNEL_OK")
</pallas_src>

<mosaic_0001>
module attributes {stable_mosaic.version = 11 : i64} {
  func.func @_lm_ce_kernel(%arg0: i32, %arg1: memref<16x32xbf16, #tpu.memory_space<vmem>>, %arg2: memref<16x1xi32, #tpu.memory_space<vmem>>, %arg3: memref<1x1xf32, #tpu.memory_space<smem>>) attributes {dimension_semantics = [#tpu.dimension_semantics<parallel>], iteration_bounds = array<i64: 1>, scalar_prefetch = 0 : i64, scratch_operands = 0 : i64, tpu.core_type = #tpu.core_type<tc>, window_params = [{transform_indices = @transform_0, window_bounds = array<i64: 16, 32>}, {transform_indices = @transform_1, window_bounds = array<i64: 16, 1>}, {transform_indices = @transform_2, window_bounds = array<i64: 1, 1>}]} {
    %c0 = arith.constant 0 : index
    %c0_0 = arith.constant 0 : index
    %0 = vector.load %arg1[%c0, %c0_0] : memref<16x32xbf16, #tpu.memory_space<vmem>>, vector<16x32xbf16>
    %1 = arith.extf %0 : vector<16x32xbf16> to vector<16x32xf32>
    %c0_1 = arith.constant 0 : index
    %c0_2 = arith.constant 0 : index
    %2 = vector.load %arg2[%c0_1, %c0_2] : memref<16x1xi32, #tpu.memory_space<vmem>>, vector<16x1xi32>
    %3 = tpu.iota {dimensions = array<i32: 1>} : vector<1x32xi32>
    %4 = vector.broadcast %3 : vector<1x32xi32> to vector<16x32xi32>
    %5 = vector.broadcast %2 : vector<16x1xi32> to vector<16x32xi32>
    %6 = arith.cmpi eq, %4, %5 : vector<16x32xi32>
    %cst = arith.constant 0.000000e+00 : f32
    %7 = vector.broadcast %cst : f32 to vector<16x32xf32>
    %8 = arith.select %6, %1, %7 : vector<16x32xi1>, vector<16x32xf32>
    %cst_3 = arith.constant dense<0.000000e+00> : vector<16xf32>
    %9 = vector.multi_reduction <add>, %8, %cst_3 [1] : vector<16x32xf32> to vector<16xf32>
    %10 = vector.shape_cast %9 : vector<16xf32> to vector<16x1xf32>
    %cst_4 = arith.constant dense<0xFF800000> : vector<16xf32>
    %11 = vector.multi_reduction <maximumf>, %1, %cst_4 [1] : vector<16x32xf32> to vector<16xf32>
    %12 = vector.shape_cast %11 : vector<16xf32> to vector<16x1xf32>
    %13 = vector.broadcast %12 : vector<16x1xf32> to vector<16x32xf32>
    %14 = arith.subf %1, %13 : vector<16x32xf32>
    %15 = math.exp %14 : vector<16x32xf32>
    %cst_5 = arith.constant dense<0.000000e+00> : vector<16xf32>
    %16 = vector.multi_reduction <add>, %15, %cst_5 [1] : vector<16x32xf32> to vector<16xf32>
    %17 = vector.shape_cast %16 : vector<16xf32> to vector<16x1xf32>
    %18 = math.log %17 : vector<16x1xf32>
    %19 = arith.addf %12, %18 : vector<16x1xf32>
    %20 = arith.subf %19, %10 : vector<16x1xf32>
    %c0_i32 = arith.constant 0 : i32
    %21 = vector.broadcast %c0_i32 : i32 to vector<16x1xi32>
    %22 = arith.cmpi sge, %2, %21 : vector<16x1xi32>
    %cst_6 = arith.constant 0.000000e+00 : f32
    %23 = vector.broadcast %cst_6 : f32 to vector<16x1xf32>
    %24 = arith.select %22, %20, %23 : vector<16x1xi1>, vector<16x1xf32>
    %25 = vector.shape_cast %24 : vector<16x1xf32> to vector<1x16x1xf32>
    %cst_7 = arith.constant dense<0.000000e+00> : vector<1xf32>
    %26 = vector.multi_reduction <add>, %25, %cst_7 [1, 2] : vector<1x16x1xf32> to vector<1xf32>
    %27 = vector.shape_cast %26 : vector<1xf32> to vector<1x1x1xf32>
    %28 = vector.extract %27[0, 0, 0] : f32 from vector<1x1x1xf32>
    %c0_8 = arith.constant 0 : index
    %c0_9 = arith.constant 0 : index
    %29 = memref.load %arg3[%c0_8, %c0_9] : memref<1x1xf32, #tpu.memory_space<smem>>
    memref.store %28, %arg3[%c0_8, %c0_9] : memref<1x1xf32, #tpu.memory_space<smem>>
    return
  }
  func.func @transform_0(%arg0: i32) -> (i32, i32) {
    %c0_i32 = arith.constant 0 : i32
    %c0_i32_0 = arith.constant 0 : i32
    return %arg0, %c0_i32 : i32, i32
  }
  func.func @transform_1(%arg0: i32) -> (i32, i32) {
    %c0_i32 = arith.constant 0 : i32
    %c0_i32_0 = arith.constant 0 : i32
    return %arg0, %c0_i32 : i32, i32
  }
  func.func @transform_2(%arg0: i32) -> (i32, i32) {
    %c0_i32 = arith.constant 0 : i32
    %c0_i32_0 = arith.constant 0 : i32
    return %arg0, %c0_i32 : i32, i32
  }
}

</mosaic_0001>

<llo_original>
// kernel: tpu_custom_call.1
$region0: #{tpu_custom_call.1}
  #allocation0 [shape = 'u32[]', space=smem, size = 0x4, offset = 0x4, fixed_abs, tag = 'smem constant byte address 0x4 - core index']
  #allocation1 [shape = 'u32[144,128]{1,0:T(1,128)}', space=vmem, size = 0x12000, scoped, tag = 'internal scratch']
  %s0 = inlined_call_operand.vmem [shape: bf16[16,32], index: 0, kind: input, shape index: {}]
  %s1 = inlined_call_operand.vmem [shape: s32[16,1], index: 1, kind: input, shape index: {}]
  %s2 = inlined_call_operand.hbm [shape: f32[1,1], index: 2, kind: output, shape index: {}]
  %s3 = sld [smem:[#allocation0]]
  $region18: #{tpu_custom_call.1} parent=0
    _
  %s5 = ssub.s32 1, %s3
  %s6 = scalar_select 0, %s5, %s3
  $region1: #{tpu_custom_call.1} parent=0
    #allocation2 [shape = 'u8[512]{0}', space=smem, size = 0x200, scoped, tag = 'output window, operand 0, single buffered']
    #allocation3 [shape = 's32[1]{0}', space=sflag, size = 0x4, scoped, tag = 'scoped memory for tpu_custom_call.1']
    %7 = vsyncpa [#allocation3], 0
    // Predicated region
    $region2: #{tpu_custom_call.1} parent=1 // pred_check
      _
    $region3: #{tpu_custom_call.1} parent=1 // pred_check_branch
      %9 = sbr.rel (0) target = $region5
    $region4: #{tpu_custom_call.1} parent=1 // pred_region
      _
    $region5: #{tpu_custom_call.1} parent=1 // pred_fallthru
      _
    // Predicated region
    $region6: #{tpu_custom_call.1} parent=1 // pred_check
      _
    $region7: #{tpu_custom_call.1} parent=1 // pred_check_branch
      %11 = sbr.rel (0) target = $region9
    $region8: #{tpu_custom_call.1} parent=1 // pred_region
      _
    $region9: #{tpu_custom_call.1} parent=1 // pred_fallthru
      _
    %v12 = vld [vmem:[%s0] sm:$0xf]
    %v13 = vld [vmem:[%s0 + $0x4] sm:$0xf]
    %v14 = vunpack.c.l.bf16 %v12
    %v15 = vunpack.c.l.bf16 %v13
    %v16 = vld [vmem:[%s1] sm:$0xff]
    %v17 = vld [vmem:[%s1 + $0x8] sm:$0xff]
    %v18 = vlaneseq
    %v19 = vand.u32 %v18, 127
    %20 = vset.pattern.permute.xlu0 0
    %21 = vperm.xlu0 %20, %v16
    %v22 = vpop.permute.xlu0 %21
    %23 = vset.pattern.permute.xlu0 0
    %24 = vperm.xlu0 %23, %v17
    %v25 = vpop.permute.xlu0 %24
    %vm26 = vcmp.eq.s32.totalorder %v19, %v22
    %vm27 = vcmp.eq.s32.totalorder %v19, %v25
    %v28 = vsel %vm26, %v14, 0.0
    %v29 = vsel %vm27, %v15, 0.0
    %vm30 = vcmask 261120
    %v31 = vsel %vm30, %v28, 0.0
    %32 = vadd.xlane.f32.xlu0 %v31
    %v33 = vpop.xlane.xlu0 %32
    %v34 = vsel %vm30, %v29, 0.0
    %35 = vadd.xlane.f32.xlu0 %v34
    %v36 = vpop.xlane.xlu0 %35
    %v37 = vsel %vm30, %v14, -inf
    %38 = vmax.xlane.f32.xlu0 %v37
    %v39 = vpop.xlane.xlu0 %38
    %v40 = vsel %vm30, %v15, -inf
    %41 = vmax.xlane.f32.xlu0 %v40
    %v42 = vpop.xlane.xlu0 %41
    %v43 = vsub.f32 %v14, %v39
    %v44 = vsub.f32 %v15, %v42
    %v45 = vmul.f32 %v43, 1.442695
    %v46 = vpow.pop %v45
    %v47 = vmul.f32 %v44, 1.442695
    %v48 = vpow.pop %v47
    %v49 = vsel %vm30, %v46, 0.0
    %50 = vadd.xlane.f32.xlu0 %v49
    %v51 = vpop.xlane.xlu0 %50
    %v52 = vsel %vm30, %v48, 0.0
    %53 = vadd.xlane.f32.xlu0 %v52
    %v54 = vpop.xlane.xlu0 %53
    %v55 = vlog2.pop %v51
    %v56 = vmul.f32 %v55, 0.6931472
    %v57 = vlog2.pop %v54
    %v58 = vmul.f32 %v57, 0.6931472
    %v59 = vadd.f32 %v39, %v56
    %v60 = vadd.f32 %v42, %v58
    %v61 = vsub.f32 %v59, %v33
    %v62 = vsub.f32 %v60, %v36
    %vm63 = vcmp.ge.s32.totalorder %v16, 0
    %vm64 = vcmp.ge.s32.totalorder %v17, 0
    %v65 = vsel %vm63, %v61, 0.0
    %v66 = vsel %vm64, %v62, 0.0
    %vm67 = vcmask 7168
    %v68 = vsel %vm67, %v65, 0.0
    %v69 = vsel %vm67, %v66, 0.0
    %v70 = vadd.f32 %v68, %v69
    %71 = vadd.xlane.f32.xlu0 %v70
    %v72 = vpop.xlane.xlu0 %71
    %v73 = vrot.slane %v72, 4
    %v74 = vadd.f32 %v72, %v73
    %v75 = vrot.slane %v74, 2
    %v76 = vadd.f32 %v74, %v75
    %v77 = vrot.slane %v76, 1
    %v78 = vadd.f32 %v76, %v77
    %s79 = vtos %v78
    %s80 = scalar_lea.smem [#allocation2], 0
    %81 = sst [smem:[%s80]] %s79
    // Predicated region
    $region10: #{tpu_custom_call.1} parent=1 // pred_check
      _
    $region11: #{tpu_custom_call.1} parent=1 // pred_check_branch
      %83 = sbr.rel (0) target = $region13
    $region12: #{tpu_custom_call.1} parent=1 // pred_region
      %s85 = ssub.s32 16, 16
      %86 = vsyncadd [#allocation3], %s85
      %89 = dma.smem_to_hbm [#allocation2], 16, %s2, [#allocation3]
    $region13: #{tpu_custom_call.1} parent=1 // pred_fallthru
      _
    // Predicated region
    $region14: #{tpu_custom_call.1} parent=1 // pred_check
      _
    $region15: #{tpu_custom_call.1} parent=1 // pred_check_branch
      %91 = sbr.rel (0) target = $region17
    $region16: #{tpu_custom_call.1} parent=1 // pred_region
      %92 = dma.done [#allocation3], 16
    $region17: #{tpu_custom_call.1} parent=1 // pred_fallthru
      _
    %93 = sfence
    %94 = vsyncpa [#allocation3], 1

</llo_original>
